<compile_context>
chip_gen: v5e
topology: v5e:2x2
jax: 0.10.0
libtpu: 0.0.40
codegen_flags: <defaults>
</compile_context>

<pallas_src>
import jax
import jax.numpy as jnp
from jax.experimental import pallas as pl
from jax.experimental.pallas import tpu as pltpu


def _round_up(n, m):
    return ((n + m - 1) // m) * m


def cnn_kernel(x_ref, w_ref, b_ref, o_ref):
    # x_ref: [TB, 16] VMEM   w_ref: [1, 16] VMEM   b_ref: [1, 1] SMEM
    # o_ref: [1, TB]  VMEM (lane-dense output slab)
    x = x_ref[...].astype(jnp.float32)            # f32 VPU math on every gen
    y = jnp.sum(x * w_ref[...], axis=1)           # [TB]   lane reduce (XLU slot)
    o_ref[...] = (y + b_ref[0, 0])[None, :].astype(o_ref.dtype)


def cnn_forward(x, fused_params, *, max_tile=4096):
    """x: [B, 16] (f32 or bf16). fused_params from fold_params(). Returns [B,1] f32."""
    w_row, b_s = fused_params
    B, K = x.shape
    assert K == 16 and w_row.shape == (1, 16) and b_s.shape == (1, 1)

    # Never cast or re-tile x in the wrapper (the kernel is HBM-bound on x);
    # pad only to a sublane multiple of 8, and only when B is ragged.
    B8 = _round_up(B, 8)
    if B8 != B:
        x = jnp.pad(x, ((0, B8 - B), (0, 0)))

    # Batch tile: as large as possible (per-grid-step overhead ~0.35 us), but
    # keep >=2 grid steps for big batches so the "parallel" axis can shard
    # across v7x's two TensorCores.  VMEM is a non-issue at these sizes.
    if B8 <= 1024:
        TB = B8                                            # single tile
    else:
        TB = min(max_tile, _round_up(-(-B8 // 2), 128))    # multiple of 128
    grid = pl.cdiv(B8, TB)
    n_out = grid * TB            # lane-dense slab; reshaped to (B, 1) below

    itemsize = jnp.dtype(x.dtype).itemsize
    cost = pl.CostEstimate(
        flops=2 * B8 * 16 + B8,
        transcendentals=0,
        bytes_accessed=B8 * 16 * itemsize + n_out * 4 + 16 * 4 + 4,
    )

    out = pl.pallas_call(
        cnn_kernel,
        out_shape=jax.ShapeDtypeStruct((1, n_out), jnp.float32),
        grid=(grid,),
        in_specs=[
            pl.BlockSpec((TB, 16), lambda i: (i, 0)),        # x, tiled on batch
            pl.BlockSpec((1, 16), lambda i: (0, 0)),         # fully folded weight row
            pl.BlockSpec((1, 1), lambda i: (0, 0),
                         memory_space=pltpu.MemorySpace.SMEM),  # folded bias scalar
        ],
        out_specs=pl.BlockSpec((1, TB), lambda i: (0, i)),   # lane-dense stores
        compiler_params=pltpu.CompilerParams(
            dimension_semantics=("parallel",)),              # 2 TCs on v7x
        cost_estimate=cost,
    )(x, w_row, b_s)

    return out.reshape(-1, 1)[:B]


def init_params(key):
    """nn.Linear-style init: U(-1/sqrt(fan_in), 1/sqrt(fan_in)); weights kept
    transposed as [in, out]."""
    def linear(key, fan_in, fan_out):
        k_w, k_b = jax.random.split(key)
        bound = 1.0 / jnp.sqrt(jnp.float32(fan_in))
        w_t = jax.random.uniform(k_w, (fan_in, fan_out), jnp.float32,
                                 minval=-bound, maxval=bound)
        b = jax.random.uniform(k_b, (1, fan_out), jnp.float32,
                               minval=-bound, maxval=bound)
        return w_t, b

    k1, k2, k3 = jax.random.split(key, 3)
    w1t, b1 = linear(k1, 16, 64)     # conv1: Linear(16, 64)
    w2t, b2 = linear(k2, 64, 128)    # conv2: Linear(64, 128)
    w3t, b3 = linear(k3, 128, 1)     # out:   Linear(128, 1)
    return (w1t, b1, w2t, b2, w3t, b3)


def fold_params(params):
    """No nonlinearities anywhere -> the whole network folds EXACTLY into a
    single Linear(16 -> 1): y = x @ w_total + b_total."""
    w1t, b1, w2t, b2, w3t, b3 = params
    w_total = w1t @ w2t @ w3t                        # [16, 1]
    b_total = b1 @ w2t @ w3t + b2 @ w3t + b3         # [1, 1]
    w_row = w_total.T.astype(jnp.float32)            # [1, 16]  (VMEM row)
    b_s = b_total.reshape(1, 1).astype(jnp.float32)  # [1, 1]   (SMEM scalar)
    return w_row, b_s


if __name__ == "__main__":
    key = jax.random.PRNGKey(0)
    k_x, k_p = jax.random.split(key)
    params = init_params(k_p)
    w1t, b1, w2t, b2, w3t, b3 = params

    def torch_ref(xx):
        h = (xx @ w1t + b1) @ w2t + b2
        return h.reshape(xx.shape[0], -1) @ w3t + b3

    fused = fold_params(params)

    # 1) small batch consistent with the module's forward (input is [B, 16]).
    B = 8
    x = jax.random.normal(k_x, (B, 16), jnp.float32)
    out = cnn_forward(x, fused)
    jax.block_until_ready(out)
    assert out.shape == (B, 1)
    assert jnp.allclose(out, torch_ref(x), atol=1e-3, rtol=1e-3)

    # 2) ragged tiny batch (exercises the pad-to-8 path).
    x7 = x[:7]
    out7 = cnn_forward(x7, fused)
    jax.block_until_ready(out7)
    assert out7.shape == (7, 1)
    assert jnp.allclose(out7, torch_ref(x7), atol=1e-3, rtol=1e-3)

    # 3) multi-tile batch (grid >= 2, lane-dense output blocks, "parallel").
    B_big = 4096
    xb = jax.random.normal(jax.random.PRNGKey(1), (B_big, 16), jnp.float32)
    outb = cnn_forward(xb, fused)
    jax.block_until_ready(outb)
    assert outb.shape == (B_big, 1)
    assert jnp.allclose(outb, torch_ref(xb), atol=1e-3, rtol=1e-3)

    # 4) bf16 activations: x stays bf16 into the kernel (no wrapper cast),
    #    upcast once inside; f32 accumulation.
    xbf = xb.astype(jnp.bfloat16)
    outbf = cnn_forward(xbf, fused)
    jax.block_until_ready(outbf)
    ref_bf = torch_ref(xbf.astype(jnp.float32))
    assert jnp.allclose(outbf, ref_bf, atol=1e-2, rtol=1e-2)

    print("KERNEL_OK")
</pallas_src>

<mosaic_0001>
module attributes {stable_mosaic.version = 11 : i64} {
  func.func @cnn_kernel(%arg0: i32, %arg1: memref<8x16xf32, #tpu.memory_space<vmem>>, %arg2: memref<1x16xf32, #tpu.memory_space<vmem>>, %arg3: memref<1x1xf32, #tpu.memory_space<smem>>, %arg4: memref<1x8xf32, #tpu.memory_space<vmem>>) attributes {dimension_semantics = [#tpu.dimension_semantics<parallel>], iteration_bounds = array<i64: 1>, scalar_prefetch = 0 : i64, scratch_operands = 0 : i64, tpu.core_type = #tpu.core_type<tc>, window_params = [{transform_indices = @transform_0, window_bounds = array<i64: 8, 16>}, {pipeline_mode = #tpu.pipeline_mode<synchronous>, transform_indices = @transform_1, window_bounds = array<i64: 1, 16>}, {transform_indices = @transform_2, window_bounds = array<i64: 1, 1>}, {transform_indices = @transform_3, window_bounds = array<i64: 1, 8>}]} {
    %c0 = arith.constant 0 : index
    %c0_0 = arith.constant 0 : index
    %0 = vector.load %arg1[%c0, %c0_0] : memref<8x16xf32, #tpu.memory_space<vmem>>, vector<8x16xf32>
    %c0_1 = arith.constant 0 : index
    %c0_2 = arith.constant 0 : index
    %1 = vector.load %arg2[%c0_1, %c0_2] : memref<1x16xf32, #tpu.memory_space<vmem>>, vector<1x16xf32>
    %2 = vector.broadcast %1 : vector<1x16xf32> to vector<8x16xf32>
    %3 = arith.mulf %0, %2 : vector<8x16xf32>
    %cst = arith.constant dense<0.000000e+00> : vector<8xf32>
    %4 = vector.multi_reduction <add>, %3, %cst [1] : vector<8x16xf32> to vector<8xf32>
    %c0_3 = arith.constant 0 : index
    %c0_4 = arith.constant 0 : index
    %5 = memref.load %arg3[%c0_3, %c0_4] : memref<1x1xf32, #tpu.memory_space<smem>>
    %6 = vector.broadcast %5 : f32 to vector<8xf32>
    %7 = arith.addf %4, %6 : vector<8xf32>
    %8 = vector.shape_cast %7 : vector<8xf32> to vector<1x8xf32>
    %c0_5 = arith.constant 0 : index
    %c0_6 = arith.constant 0 : index
    %9 = vector.load %arg4[%c0_5, %c0_6] : memref<1x8xf32, #tpu.memory_space<vmem>>, vector<1x8xf32>
    tpu.vector_store %arg4[%c0_5, %c0_6], %8 {strides = array<i32>} : memref<1x8xf32, #tpu.memory_space<vmem>>, vector<1x8xf32>,
    return
  }
  func.func @transform_0(%arg0: i32) -> (i32, i32) {
    %c0_i32 = arith.constant 0 : i32
    %c0_i32_0 = arith.constant 0 : i32
    return %arg0, %c0_i32 : i32, i32
  }
  func.func @transform_1(%arg0: i32) -> (i32, i32) {
    %c0_i32 = arith.constant 0 : i32
    %c0_i32_0 = arith.constant 0 : i32
    %c0_i32_1 = arith.constant 0 : i32
    return %c0_i32, %c0_i32_0 : i32, i32
  }
  func.func @transform_2(%arg0: i32) -> (i32, i32) {
    %c0_i32 = arith.constant 0 : i32
    %c0_i32_0 = arith.constant 0 : i32
    %c0_i32_1 = arith.constant 0 : i32
    return %c0_i32, %c0_i32_0 : i32, i32
  }
  func.func @transform_3(%arg0: i32) -> (i32, i32) {
    %c0_i32 = arith.constant 0 : i32
    %c0_i32_0 = arith.constant 0 : i32
    return %c0_i32, %arg0 : i32, i32
  }
}

</mosaic_0001>

<llo_original>
// kernel: tpu_custom_call.1
$region0: #{tpu_custom_call.1}
  #allocation0 [shape = 'u32[]', space=smem, size = 0x4, offset = 0x4, fixed_abs, tag = 'smem constant byte address 0x4 - core index']
  #allocation1 [shape = 'u32[72,128]{1,0:T(1,128)}', space=vmem, size = 0x9000, scoped, tag = 'internal scratch']
  #allocation2 [shape = 'f32[1,1]{1,0:T(1,128)S(6)}', space=smem, size = 0x200, scoped, tag = 'scoped memory for tpu_custom_call.1']
  %s0 = inlined_call_operand.hbm [shape: f32[8,16], index: 0, kind: input, shape index: {}]
  %s1 = inlined_call_operand.vmem [shape: f32[1,16], index: 1, kind: input, shape index: {}]
  %s2 = inlined_call_operand.<no memory space> [shape: f32[1,1], index: 2, kind: input, shape index: {}]
  %s3 = inlined_call_operand.hbm [shape: f32[1,8], index: 3, kind: output, shape index: {}]
  %s4 = sld [smem:[#allocation0]]
  $region26: #{tpu_custom_call.1} parent=0
    _
  %s6 = ssub.s32 1, %s4
  %s7 = scalar_select 0, %s6, %s4
  %8 = sst [smem:[#allocation2]] %s2
  $region1: #{tpu_custom_call.1} parent=0
    #allocation3 [shape = 'u8[4096]{0}', space=vmem, size = 0x1000, scoped, tag = 'input window, operand 0, single buffered']
    #allocation4 [shape = 's32[1]{0}', space=sflag, size = 0x4, scoped, tag = 'scoped memory for tpu_custom_call.1']
    #allocation5 [shape = 's32[1]{0}', space=sflag, size = 0x4, scoped, tag = 'scoped memory for tpu_custom_call.1']
    #allocation6 [shape = 'u8[512]{0}', space=vmem, size = 0x400, scoped, tag = 'output window, operand 0, single buffered']
    %9 = vsyncpa [#allocation4], 0
    %10 = vsyncpa [#allocation5], 0
    // Predicated region
    $region2: #{tpu_custom_call.1} parent=1 // pred_check
      _
    $region3: #{tpu_custom_call.1} parent=1 // pred_check_branch
      %12 = sbr.rel (0) target = $region5
    $region4: #{tpu_custom_call.1} parent=1 // pred_region
      %14 = vsyncadd [#allocation4], 0
      %s16 = sshll.u32 %s0, 4
      %s17 = int_to_ptr.hbm [resolvable:$true] %s16
      %s18 = sshll.u32 [#allocation3], 4
      %s19 = int_to_ptr.vmem [resolvable:$true] %s18
      %21 = dma.hbm_to_vmem [thread:$0]  %s17, 128, %s19, [#allocation4]
    $region5: #{tpu_custom_call.1} parent=1 // pred_fallthru
      _
    // Predicated region
    $region6: #{tpu_custom_call.1} parent=1 // pred_check
      _
    $region7: #{tpu_custom_call.1} parent=1 // pred_check_branch
      %23 = sbr.rel (0) target = $region9
    $region8: #{tpu_custom_call.1} parent=1 // pred_region
      _
    $region9: #{tpu_custom_call.1} parent=1 // pred_fallthru
      _
    // Predicated region
    $region10: #{tpu_custom_call.1} parent=1 // pred_check
      _
    $region11: #{tpu_custom_call.1} parent=1 // pred_check_branch
      %25 = sbr.rel (0) target = $region13
    $region12: #{tpu_custom_call.1} parent=1 // pred_region
      _
    $region13: #{tpu_custom_call.1} parent=1 // pred_fallthru
      _
    // Predicated region
    $region14: #{tpu_custom_call.1} parent=1 // pred_check
      _
    $region15: #{tpu_custom_call.1} parent=1 // pred_check_branch
      %27 = sbr.rel (0) target = $region17
    $region16: #{tpu_custom_call.1} parent=1 // pred_region
      %29 = dma.done [#allocation4], 128
    $region17: #{tpu_custom_call.1} parent=1 // pred_fallthru
      _
    %v30 = vld [vmem:[#allocation3] sm:$0xff]
    %v31 = vld [vmem:[%s1] sm:$0x1]
    %v33 = vperm.slane %v31, 0
    %v35 = vmul.f32 %v30, %v33
    %vm36 = vcmask 130048
    %v37 = vsel %vm36, %v35, 0.0
    %38 = vadd.xlane.f32.xlu0 %v37
    %v39 = vpop.xlane.xlu0 %38
    %s40 = sld [smem:[#allocation2]]
    %v41 = vstv %s40
    %v42 = vadd.f32 %v39, %v41
    %v44 = vlaneseq
    %v45 = vand.u32 %v44, 127
    %v46 = vperm.slane %v42, %v45
    %vm48 = vcmask 57344
    %49 = vst.msk [vmem:[#allocation6] sm:$0x1] %vm48, %v46
    // Predicated region
    $region18: #{tpu_custom_call.1} parent=1 // pred_check
      _
    $region19: #{tpu_custom_call.1} parent=1 // pred_check_branch
      %51 = sbr.rel (0) target = $region21
    $region20: #{tpu_custom_call.1} parent=1 // pred_region
      %53 = vsyncadd [#allocation5], 0
      %s55 = sshll.u32 [#allocation6], 4
      %s56 = int_to_ptr.vmem [resolvable:$true] %s55
      %s57 = sshll.u32 %s3, 4
      %s58 = int_to_ptr.hbm [resolvable:$true] %s57
      %60 = dma.vmem_to_hbm [thread:$0]  %s56, 16, %s58, [#allocation5]
    $region21: #{tpu_custom_call.1} parent=1 // pred_fallthru
      _
    // Predicated region
    $region22: #{tpu_custom_call.1} parent=1 // pred_check
      _
    $region23: #{tpu_custom_call.1} parent=1 // pred_check_branch
      %62 = sbr.rel (0) target = $region25
    $region24: #{tpu_custom_call.1} parent=1 // pred_region
      %64 = dma.done [#allocation5], 16
    $region25: #{tpu_custom_call.1} parent=1 // pred_fallthru
      _
    %65 = vsyncpa [#allocation4], 1
    %66 = vsyncpa [#allocation5], 1

</llo_original>
